<compile_context>
chip_gen: v6e
topology: v6e:2x2x1
jax: 0.10.0
libtpu: 0.0.40
codegen_flags: <defaults>
</compile_context>

<pallas_src>
import numpy as np
import jax
import jax.numpy as jnp
from jax import lax
from jax.experimental import pallas as pl
from jax.experimental.pallas import tpu as pltpu

# Problem sizes implied by the module: conv output must be 7x7 so view(-1, 49)
# works -> H = W = 15 with kernel 3 / stride 2 / no padding.
H = W = 15
OH = OW = 7
KH = KW = 3
STRIDE = 2
F1, F2, F3 = 30, 30, 10

HW = H * W          # 225  (flattened conv-input features, kept unpadded)
FEAT_PAD = 128      # lane-padded width for all FC layers / output

_VMEM_LIMIT_BYTES = 48 * 1024 * 1024   # fits tile_n=4096 footprint (~21 MiB),
                                       # below v7x's 64 MiB physical VMEM.


def net_kernel(x_ref, wc_ref, w1_ref, w2_ref, w3_ref, out_ref):
    """One batch tile of the whole forward pass.

    x_ref  : VMEM (TILE_N, 225)   flattened input images (no padding)
    wc_ref : VMEM (225, 128)      conv folded into im2col-effective matrix
    w1_ref : VMEM (128, 128)      fc1.weight.T zero-padded
    w2_ref : VMEM (128, 128)      fc2.weight.T zero-padded
    w3_ref : VMEM (128, 128)      fc3.weight.T zero-padded
    out_ref: VMEM (TILE_N, 128)   fc3 PRE-activation (real logits in [:, :10])
    """
    x = x_ref[...]                                                    # (T, 225)
    # conv1 (stride-2 3x3, no bias) + relu as a single MXU matmul
    conv = jnp.maximum(
        jnp.dot(x, wc_ref[...], preferred_element_type=jnp.float32), 0.0)
    # fc1 / fc2 with tanh (zero padding is tanh(0)=0 -> stays inert)
    h = jnp.tanh(jnp.dot(conv, w1_ref[...], preferred_element_type=jnp.float32))
    h = jnp.tanh(jnp.dot(h, w2_ref[...], preferred_element_type=jnp.float32))
    # fc3 pre-activation; the final tanh is applied in the wrapper on (n, 10)
    out_ref[...] = jnp.dot(h, w3_ref[...], preferred_element_type=jnp.float32)


def _round_up(a, b):
    return ((a + b - 1) // b) * b


def prepare_params(conv_w, fc1_w, fc2_w, fc3_w):
    """One-time host (numpy) weight preparation. Call once, reuse per step.

    conv_w: (1,1,3,3);  fc*_w: PyTorch (out, in) layout.
    Returns device arrays (w_eff, w1p, w2p, w3p).
    """
    cw = np.asarray(conv_w, np.float32).reshape(KH, KW)
    # Fold the stride-2 3x3 conv into a single (225, 128) effective matrix:
    #   W_eff[(2r+di)*W + (2c+dj), r*7+c] = cw[di, dj]
    w_eff = np.zeros((HW, FEAT_PAD), np.float32)
    for di in range(KH):
        for dj in range(KW):
            for r in range(OH):
                for c in range(OW):
                    w_eff[(STRIDE * r + di) * W + (STRIDE * c + dj),
                          r * OW + c] += cw[di, dj]

    def _padT(w):
        w = np.asarray(w, np.float32).T                    # (in, out)
        out = np.zeros((FEAT_PAD, FEAT_PAD), np.float32)
        out[: w.shape[0], : w.shape[1]] = w
        return out

    return (jnp.asarray(w_eff), jnp.asarray(_padT(fc1_w)),
            jnp.asarray(_padT(fc2_w)), jnp.asarray(_padT(fc3_w)))


def _choose_tile_n(n):
    if n <= 256:
        # One exact block: block dims equal to the array dims are legal, so no
        # batch padding is needed even for tiny / odd batch sizes.
        return n
    # Large batches: big tiles (low per-step overhead) but always >= 2 grid
    # steps so the "parallel" batch axis can shard across v7x's two TCs.
    half = _round_up(-(-n // 2), 256)
    return min(4096, half)


def net_forward(x_nchw, params):
    """x_nchw: (N, 1, 15, 15) float;  params: output of prepare_params()."""
    w_eff, w1p, w2p, w3p = params
    n = x_nchw.shape[0]
    # Free reshape (no padded copy of x is materialized).
    x_flat = x_nchw.astype(jnp.float32).reshape(n, HW)

    tile_n = _choose_tile_n(n)
    grid = (pl.cdiv(n, tile_n),)

    weight_bytes = (HW * FEAT_PAD + 3 * FEAT_PAD * FEAT_PAD) * 4
    flops = 2 * n * (HW * FEAT_PAD + 3 * FEAT_PAD * FEAT_PAD)
    bytes_accessed = n * (HW + FEAT_PAD) * 4 + weight_bytes

    out_padded = pl.pallas_call(
        net_kernel,
        out_shape=jax.ShapeDtypeStruct((n, FEAT_PAD), jnp.float32),
        grid=grid,
        in_specs=[
            pl.BlockSpec((tile_n, HW), lambda i: (i, 0)),            # x tile
            pl.BlockSpec((HW, FEAT_PAD), lambda i: (0, 0)),          # conv (folded)
            pl.BlockSpec((FEAT_PAD, FEAT_PAD), lambda i: (0, 0)),    # fc1.T
            pl.BlockSpec((FEAT_PAD, FEAT_PAD), lambda i: (0, 0)),    # fc2.T
            pl.BlockSpec((FEAT_PAD, FEAT_PAD), lambda i: (0, 0)),    # fc3.T
        ],
        out_specs=pl.BlockSpec((tile_n, FEAT_PAD), lambda i: (i, 0)),
        compiler_params=pltpu.CompilerParams(
            dimension_semantics=("parallel",),
            vmem_limit_bytes=_VMEM_LIMIT_BYTES),
        cost_estimate=pl.CostEstimate(
            flops=flops,
            transcendentals=2 * n * FEAT_PAD,
            bytes_accessed=bytes_accessed),
    )(x_flat, w_eff, w1p, w2p, w3p)

    # Final tanh on only the 10 live logits (fuses with the slice under jit);
    # any ragged-tail garbage rows were never part of [:n] here since
    # out_shape already has exactly n rows.
    return jnp.tanh(out_padded[:, :F3])


def net_forward_ref(x_nchw, conv_w, fc1_w, fc2_w, fc3_w):
    """Pure-JAX reference (independent path through lax.conv)."""
    x = x_nchw.astype(jnp.float32)
    y = lax.conv_general_dilated(
        x, conv_w.astype(jnp.float32),
        window_strides=(STRIDE, STRIDE), padding="VALID",
        dimension_numbers=("NCHW", "OIHW", "NCHW"))
    y = jnp.maximum(y, 0.0).reshape(x.shape[0], OH * OW)
    y = jnp.tanh(y @ fc1_w.astype(jnp.float32).T)
    y = jnp.tanh(y @ fc2_w.astype(jnp.float32).T)
    y = jnp.tanh(y @ fc3_w.astype(jnp.float32).T)
    return y


if __name__ == "__main__":
    key = jax.random.PRNGKey(0)
    kx, k0, k1, k2, k3 = jax.random.split(key, 5)

    batch = 2
    x = jax.random.normal(kx, (batch, 1, H, W), jnp.float32)

    # Deterministic parameter init (same shapes as the PyTorch module).
    conv_w = jax.random.normal(k0, (1, 1, KH, KW), jnp.float32) * 0.3
    fc1_w = jax.random.normal(k1, (F1, OH * OW), jnp.float32) * (1.0 / np.sqrt(OH * OW))
    fc2_w = jax.random.normal(k2, (F2, F1), jnp.float32) * (1.0 / np.sqrt(F1))
    fc3_w = jax.random.normal(k3, (F3, F2), jnp.float32) * (1.0 / np.sqrt(F2))

    # One-time weight prep (hoisted out of the per-call path).
    params = prepare_params(np.asarray(conv_w), np.asarray(fc1_w),
                            np.asarray(fc2_w), np.asarray(fc3_w))

    fwd = jax.jit(net_forward)
    out = jax.block_until_ready(fwd(x, params))

    ref = jax.block_until_ready(net_forward_ref(x, conv_w, fc1_w, fc2_w, fc3_w))
    assert out.shape == (batch, F3)
    np.testing.assert_allclose(np.asarray(out), np.asarray(ref), rtol=1e-5, atol=1e-5)

    print("KERNEL_OK")
</pallas_src>

<mosaic_0001>
module attributes {stable_mosaic.version = 11 : i64} {
  func.func @net_kernel(%arg0: i32, %arg1: memref<2x225xf32, #tpu.memory_space<vmem>>, %arg2: memref<225x128xf32, #tpu.memory_space<vmem>>, %arg3: memref<128x128xf32, #tpu.memory_space<vmem>>, %arg4: memref<128x128xf32, #tpu.memory_space<vmem>>, %arg5: memref<128x128xf32, #tpu.memory_space<vmem>>, %arg6: memref<2x128xf32, #tpu.memory_space<vmem>>) attributes {dimension_semantics = [#tpu.dimension_semantics<parallel>], iteration_bounds = array<i64: 1>, scalar_prefetch = 0 : i64, scratch_operands = 0 : i64, tpu.core_type = #tpu.core_type<tc>, window_params = [{transform_indices = @transform_0, window_bounds = array<i64: 2, 225>}, {pipeline_mode = #tpu.pipeline_mode<synchronous>, transform_indices = @transform_1, window_bounds = array<i64: 225, 128>}, {pipeline_mode = #tpu.pipeline_mode<synchronous>, transform_indices = @transform_2, window_bounds = array<i64: 128, 128>}, {pipeline_mode = #tpu.pipeline_mode<synchronous>, transform_indices = @transform_3, window_bounds = array<i64: 128, 128>}, {pipeline_mode = #tpu.pipeline_mode<synchronous>, transform_indices = @transform_4, window_bounds = array<i64: 128, 128>}, {transform_indices = @transform_5, window_bounds = array<i64: 2, 128>}]} {
    %c0 = arith.constant 0 : index
    %c0_0 = arith.constant 0 : index
    %0 = vector.load %arg1[%c0, %c0_0] : memref<2x225xf32, #tpu.memory_space<vmem>>, vector<2x225xf32>
    %c0_1 = arith.constant 0 : index
    %c0_2 = arith.constant 0 : index
    %1 = vector.load %arg2[%c0_1, %c0_2] : memref<225x128xf32, #tpu.memory_space<vmem>>, vector<225x128xf32>
    %cst = arith.constant dense<0.000000e+00> : vector<2x128xf32>
    %2 = tpu.matmul %0, %1, %cst {dimension_numbers = #tpu.dot_dimension_numbers<[1], [0], [0], [1], [0, 0, 1, 1], [], []>} : vector<2x225xf32>, vector<225x128xf32>, vector<2x128xf32> -> vector<2x128xf32>
    %cst_3 = arith.constant 0.000000e+00 : f32
    %3 = vector.broadcast %cst_3 : f32 to vector<2x128xf32>
    %4 = arith.maximumf %2, %3 : vector<2x128xf32>
    %c0_4 = arith.constant 0 : index
    %c0_5 = arith.constant 0 : index
    %5 = vector.load %arg3[%c0_4, %c0_5] : memref<128x128xf32, #tpu.memory_space<vmem>>, vector<128x128xf32>
    %cst_6 = arith.constant dense<0.000000e+00> : vector<2x128xf32>
    %6 = tpu.matmul %4, %5, %cst_6 {dimension_numbers = #tpu.dot_dimension_numbers<[1], [0], [0], [1], [0, 0, 1, 1], [], []>} : vector<2x128xf32>, vector<128x128xf32>, vector<2x128xf32> -> vector<2x128xf32>
    %7 = math.tanh %6 : vector<2x128xf32>
    %c0_7 = arith.constant 0 : index
    %c0_8 = arith.constant 0 : index
    %8 = vector.load %arg4[%c0_7, %c0_8] : memref<128x128xf32, #tpu.memory_space<vmem>>, vector<128x128xf32>
    %cst_9 = arith.constant dense<0.000000e+00> : vector<2x128xf32>
    %9 = tpu.matmul %7, %8, %cst_9 {dimension_numbers = #tpu.dot_dimension_numbers<[1], [0], [0], [1], [0, 0, 1, 1], [], []>} : vector<2x128xf32>, vector<128x128xf32>, vector<2x128xf32> -> vector<2x128xf32>
    %10 = math.tanh %9 : vector<2x128xf32>
    %c0_10 = arith.constant 0 : index
    %c0_11 = arith.constant 0 : index
    %11 = vector.load %arg5[%c0_10, %c0_11] : memref<128x128xf32, #tpu.memory_space<vmem>>, vector<128x128xf32>
    %cst_12 = arith.constant dense<0.000000e+00> : vector<2x128xf32>
    %12 = tpu.matmul %10, %11, %cst_12 {dimension_numbers = #tpu.dot_dimension_numbers<[1], [0], [0], [1], [0, 0, 1, 1], [], []>} : vector<2x128xf32>, vector<128x128xf32>, vector<2x128xf32> -> vector<2x128xf32>
    %c0_13 = arith.constant 0 : index
    %c0_14 = arith.constant 0 : index
    %13 = vector.load %arg6[%c0_13, %c0_14] : memref<2x128xf32, #tpu.memory_space<vmem>>, vector<2x128xf32>
    tpu.vector_store %arg6[%c0_13, %c0_14], %12 {strides = array<i32>} : memref<2x128xf32, #tpu.memory_space<vmem>>, vector<2x128xf32>,
    return
  }
  func.func @transform_0(%arg0: i32) -> (i32, i32) {
    %c0_i32 = arith.constant 0 : i32
    %c0_i32_0 = arith.constant 0 : i32
    return %arg0, %c0_i32 : i32, i32
  }
  func.func @transform_1(%arg0: i32) -> (i32, i32) {
    %c0_i32 = arith.constant 0 : i32
    %c0_i32_0 = arith.constant 0 : i32
    %c0_i32_1 = arith.constant 0 : i32
    return %c0_i32, %c0_i32_0 : i32, i32
  }
  func.func @transform_2(%arg0: i32) -> (i32, i32) {
    %c0_i32 = arith.constant 0 : i32
    %c0_i32_0 = arith.constant 0 : i32
    %c0_i32_1 = arith.constant 0 : i32
    return %c0_i32, %c0_i32_0 : i32, i32
  }
  func.func @transform_3(%arg0: i32) -> (i32, i32) {
    %c0_i32 = arith.constant 0 : i32
    %c0_i32_0 = arith.constant 0 : i32
    %c0_i32_1 = arith.constant 0 : i32
    return %c0_i32, %c0_i32_0 : i32, i32
  }
  func.func @transform_4(%arg0: i32) -> (i32, i32) {
    %c0_i32 = arith.constant 0 : i32
    %c0_i32_0 = arith.constant 0 : i32
    %c0_i32_1 = arith.constant 0 : i32
    return %c0_i32, %c0_i32_0 : i32, i32
  }
  func.func @transform_5(%arg0: i32) -> (i32, i32) {
    %c0_i32 = arith.constant 0 : i32
    %c0_i32_0 = arith.constant 0 : i32
    return %arg0, %c0_i32 : i32, i32
  }
}

</mosaic_0001>

<llo_original>
// kernel: net_forward.1
$region0: #{net_forward.1}
  #allocation0 [shape = 'u32[]', space=smem, size = 0x4, offset = 0x4, fixed_abs, tag = 'smem constant byte address 0x4 - core index']
  #allocation1 [shape = 'u32[144,128]{1,0:T(1,128)}', space=vmem, size = 0x12000, scoped, tag = 'internal scratch']
  %s0 = inlined_call_operand.vmem [shape: f32[2,225], index: 0, kind: input, shape index: {}]
  %s1 = inlined_call_operand.hbm [shape: f32[225,128], index: 1, kind: input, shape index: {}]
  %s2 = inlined_call_operand.hbm [shape: f32[128,128], index: 2, kind: input, shape index: {}]
  %s3 = inlined_call_operand.hbm [shape: f32[128,128], index: 3, kind: input, shape index: {}]
  %s4 = inlined_call_operand.hbm [shape: f32[128,128], index: 4, kind: input, shape index: {}]
  %s5 = inlined_call_operand.vmem [shape: f32[2,128], index: 5, kind: output, shape index: {}]
  %s6 = sld [smem:[#allocation0]]
  $region46: #{net_forward.1} parent=0
    _
  %s8 = ssub.s32 1, %s6
  %s9 = scalar_select 0, %s8, %s6
  $region1: #{net_forward.1} parent=0
    #allocation2 [shape = 'u8[118784]{0}', space=vmem, size = 0x1d000, scoped, tag = 'input window, operand 1, single buffered']
    #allocation3 [shape = 's32[1]{0}', space=sflag, size = 0x4, scoped, tag = 'scoped memory for net_forward.1']
    #allocation4 [shape = 'u8[65536]{0}', space=vmem, size = 0x10000, scoped, tag = 'input window, operand 2, single buffered']
    #allocation5 [shape = 's32[1]{0}', space=sflag, size = 0x4, scoped, tag = 'scoped memory for net_forward.1']
    #allocation6 [shape = 'u8[65536]{0}', space=vmem, size = 0x10000, scoped, tag = 'input window, operand 3, single buffered']
    #allocation7 [shape = 'u8[65536]{0}', space=vmem, size = 0x10000, scoped, tag = 'input window, operand 4, single buffered']
    #allocation8 [shape = 's32[1]{0}', space=sflag, size = 0x4, scoped, tag = 'scoped memory for net_forward.1']
    %10 = vsyncpa [#allocation3], 0
    %11 = vsyncpa [#allocation5], 0
    %12 = vsyncpa [#allocation8], 0
    // Predicated region
    $region2: #{net_forward.1} parent=1 // pred_check
      _
    $region3: #{net_forward.1} parent=1 // pred_check_branch
      %14 = sbr.rel (0) target = $region5
    $region4: #{net_forward.1} parent=1 // pred_region
      _
    $region5: #{net_forward.1} parent=1 // pred_fallthru
      _
    // Predicated region
    $region6: #{net_forward.1} parent=1 // pred_check
      _
    $region7: #{net_forward.1} parent=1 // pred_check_branch
      %16 = sbr.rel (0) target = $region9
    $region8: #{net_forward.1} parent=1 // pred_region
      %s18 = ssub.s32 3712, 3712
      %19 = vsyncadd [#allocation3], %s18
      %s20 = sshll.u32 [#allocation2], 4
      %s21 = int_to_ptr.vmem [resolvable:$true] %s20
      %26 = dma.hbm_to_vmem [thread:$0]  %s1, 3712, %s21, [#allocation3], 128, 128, 8
    $region9: #{net_forward.1} parent=1 // pred_fallthru
      _
    // Predicated region
    $region10: #{net_forward.1} parent=1 // pred_check
      _
    $region11: #{net_forward.1} parent=1 // pred_check_branch
      %28 = sbr.rel (0) target = $region13
    $region12: #{net_forward.1} parent=1 // pred_region
      %s30 = ssub.s32 2048, 2048
      %31 = vsyncadd [#allocation5], %s30
      %s32 = sshll.u32 [#allocation4], 4
      %s33 = int_to_ptr.vmem [resolvable:$true] %s32
      %38 = dma.hbm_to_vmem [thread:$0]  %s2, 2048, %s33, [#allocation5], 128, 128, 8
    $region13: #{net_forward.1} parent=1 // pred_fallthru
      _
    // Predicated region
    $region14: #{net_forward.1} parent=1 // pred_check
      _
    $region15: #{net_forward.1} parent=1 // pred_check_branch
      %40 = sbr.rel (0) target = $region17
    $region16: #{net_forward.1} parent=1 // pred_region
      %s42 = ssub.s32 2048, 2048
      %43 = vsyncadd [#allocation5], %s42
      %s44 = sshll.u32 [#allocation6], 4
      %s45 = int_to_ptr.vmem [resolvable:$true] %s44
      %50 = dma.hbm_to_vmem [thread:$0]  %s3, 2048, %s45, [#allocation5], 128, 128, 8
    $region17: #{net_forward.1} parent=1 // pred_fallthru
      _
    // Predicated region
    $region18: #{net_forward.1} parent=1 // pred_check
      _
    $region19: #{net_forward.1} parent=1 // pred_check_branch
      %52 = sbr.rel (0) target = $region21
    $region20: #{net_forward.1} parent=1 // pred_region
      %s54 = ssub.s32 2048, 2048
      %55 = vsyncadd [#allocation8], %s54
      %s56 = sshll.u32 [#allocation7], 4
      %s57 = int_to_ptr.vmem [resolvable:$true] %s56
      %62 = dma.hbm_to_vmem [thread:$0]  %s4, 2048, %s57, [#allocation8], 128, 128, 8
    $region21: #{net_forward.1} parent=1 // pred_fallthru
      _
    // Predicated region
    $region22: #{net_forward.1} parent=1 // pred_check
      _
    $region23: #{net_forward.1} parent=1 // pred_check_branch
      %64 = sbr.rel (0) target = $region25
    $region24: #{net_forward.1} parent=1 // pred_region
      %65 = dma.done [#allocation3], 3712
    $region25: #{net_forward.1} parent=1 // pred_fallthru
      _
    // Predicated region
    $region26: #{net_forward.1} parent=1 // pred_check
      _
    $region27: #{net_forward.1} parent=1 // pred_check_branch
      %67 = sbr.rel (0) target = $region29
    $region28: #{net_forward.1} parent=1 // pred_region
      %68 = dma.done [#allocation5], 2048
    $region29: #{net_forward.1} parent=1 // pred_fallthru
      _
    // Predicated region
    $region30: #{net_forward.1} parent=1 // pred_check
      _
    $region31: #{net_forward.1} parent=1 // pred_check_branch
      %70 = sbr.rel (0) target = $region33
    $region32: #{net_forward.1} parent=1 // pred_region
      %71 = dma.done [#allocation5], 2048
    $region33: #{net_forward.1} parent=1 // pred_fallthru
      _
    // Predicated region
    $region34: #{net_forward.1} parent=1 // pred_check
      _
    $region35: #{net_forward.1} parent=1 // pred_check_branch
      %73 = sbr.rel (0) target = $region37
    $region36: #{net_forward.1} parent=1 // pred_region
      %74 = dma.done [#allocation8], 2048
    $region37: #{net_forward.1} parent=1 // pred_fallthru
      _
    %v75 = vld [vmem:[%s0] sm:$0xf]
    %v76 = vld [vmem:[#allocation2] sm:$0xff]
    %v77 = vld [vmem:[#allocation2 + $0x8] sm:$0xff]
    %v78 = vld [vmem:[#allocation2 + $0x10] sm:$0xff]
    %v79 = vld [vmem:[#allocation2 + $0x18] sm:$0xff]
    %v80 = vld [vmem:[#allocation2 + $0x20] sm:$0xff]
    %v81 = vld [vmem:[#allocation2 + $0x28] sm:$0xff]
    %v82 = vld [vmem:[#allocation2 + $0x30] sm:$0xff]
    %v83 = vld [vmem:[#allocation2 + $0x38] sm:$0xff]
    %v84 = vld [vmem:[#allocation2 + $0x40] sm:$0xff]
    %v85 = vld [vmem:[#allocation2 + $0x48] sm:$0xff]
    %v86 = vld [vmem:[#allocation2 + $0x50] sm:$0xff]
    %v87 = vld [vmem:[#allocation2 + $0x58] sm:$0xff]
    %v88 = vld [vmem:[#allocation2 + $0x60] sm:$0xff]
    %v89 = vld [vmem:[#allocation2 + $0x68] sm:$0xff]
    %v90 = vld [vmem:[#allocation2 + $0x70] sm:$0xff]
    %v91 = vld [vmem:[#allocation2 + $0x78] sm:$0xff]
    %v92 = vld [vmem:[#allocation2 + $0x80] sm:$0xff]
    %v93 = vld [vmem:[#allocation2 + $0x88] sm:$0xff]
    %v94 = vld [vmem:[#allocation2 + $0x90] sm:$0xff]
    %v95 = vld [vmem:[#allocation2 + $0x98] sm:$0xff]
    %v96 = vld [vmem:[#allocation2 + $0xa0] sm:$0xff]
    %v97 = vld [vmem:[#allocation2 + $0xa8] sm:$0xff]
    %v98 = vld [vmem:[#allocation2 + $0xb0] sm:$0xff]
    %v99 = vld [vmem:[#allocation2 + $0xb8] sm:$0xff]
    %v100 = vld [vmem:[#allocation2 + $0xc0] sm:$0xff]
    %v101 = vld [vmem:[#allocation2 + $0xc8] sm:$0xff]
    %v102 = vld [vmem:[#allocation2 + $0xd0] sm:$0xff]
    %v103 = vld [vmem:[#allocation2 + $0xd8] sm:$0xff]
    %v104 = vld [vmem:[#allocation2 + $0xe0] sm:$0x1]
    %v107 = vunpack.c.l.s4 1983009808
    %v108 = vunpack.c.0.s8 %v107
    %v109 = vlaneseq
    %v110 = vshrl.u32 %v109, 7
    %v111 = vsub.s32 %v108, %v110
    %v112 = vrot.slane %v75, %v111
    %v113 = vcombine.high %v112, %v112
    %vm115 = vcmask 793600
    %v116 = vsel %vm115, %v113, 0
    %vm118 = vcmask 1040384
    %v120 = vsel %vm118, %v104, 0
    %122 = vmatprep.subr.mxu0 0.0
    %123 = vmatpush1.msra.mxu0 %v91
    %124 = vmatprep.subr.mxu0 0.0
    %125 = vmatpush1.msra.mxu0 %v90
    %126 = vmatprep.subr.mxu0 0.0
    %127 = vmatpush1.msra.mxu0 %v89
    %128 = vmatprep.subr.mxu0 0.0
    %129 = vmatpush1.msra.mxu0 %v88
    %130 = vmatprep.subr.mxu0 0.0
    %131 = vmatpush1.msra.mxu0 %v87
    %132 = vmatprep.subr.mxu0 0.0
    %133 = vmatpush1.msra.mxu0 %v86
    %134 = vmatprep.subr.mxu0 0.0
    %135 = vmatpush1.msra.mxu0 %v85
    %136 = vmatprep.subr.mxu0 0.0
    %137 = vmatpush1.msra.mxu0 %v84
    %138 = vmatprep.subr.mxu0 0.0
    %139 = vmatpush1.msra.mxu0 %v83
    %140 = vmatprep.subr.mxu0 0.0
    %141 = vmatpush1.msra.mxu0 %v82
    %142 = vmatprep.subr.mxu0 0.0
    %143 = vmatpush1.msra.mxu0 %v81
    %144 = vmatprep.subr.mxu0 0.0
    %145 = vmatpush1.msra.mxu0 %v80
    %146 = vmatprep.subr.mxu0 0.0
    %147 = vmatpush1.msra.mxu0 %v79
    %148 = vmatprep.subr.mxu0 0.0
    %149 = vmatpush1.msra.mxu0 %v78
    %150 = vmatprep.subr.mxu0 0.0
    %151 = vmatpush1.msra.mxu0 %v77
    %152 = vmatprep.subr.mxu0 0.0
    %153 = vmatpush1.msra.mxu0 %v76
    %154 = vmatprep.subr.mxu0 0.0
    %155 = vmatpush2.msra.mxu0 0.0
    %156 = vmatprep.subr.mxu0 0.0
    %157 = vmatpush2.msra.mxu0 0.0
    %158 = vmatprep.subr.mxu0 0.0
    %159 = vmatpush2.msra.mxu0 0.0
    %160 = vmatprep.subr.mxu0 0.0
    %161 = vmatpush2.msra.mxu0 %v120
    %162 = vmatprep.subr.mxu0 0.0
    %163 = vmatpush2.msra.mxu0 %v103
    %164 = vmatprep.subr.mxu0 0.0
    %165 = vmatpush2.msra.mxu0 %v102
    %166 = vmatprep.subr.mxu0 0.0
    %167 = vmatpush2.msra.mxu0 %v101
    %168 = vmatprep.subr.mxu0 0.0
    %169 = vmatpush2.msra.mxu0 %v100
    %170 = vmatprep.subr.mxu0 0.0
    %171 = vmatpush2.msra.mxu0 %v99
    %172 = vmatprep.subr.mxu0 0.0
    %173 = vmatpush2.msra.mxu0 %v98
    %174 = vmatprep.subr.mxu0 0.0
    %175 = vmatpush2.msra.mxu0 %v97
    %176 = vmatprep.subr.mxu0 0.0
    %177 = vmatpush2.msra.mxu0 %v96
    %178 = vmatprep.subr.mxu0 0.0
    %179 = vmatpush2.msra.mxu0 %v95
    %180 = vmatprep.subr.mxu0 0.0
    %181 = vmatpush2.msra.mxu0 %v94
    %182 = vmatprep.subr.mxu0 0.0
    %183 = vmatpush2.msra.mxu0 %v93
    %184 = vmatprep.subr.mxu0 0.0
    %185 = vmatpush2.msra.mxu0 %v92
    %186 = vmatprep.mubr.f32.mxu0 %v116
    %187 = vmatmul.mubr.f32.gmra.mxu0 %v112
    %v188 = vpop.f32.mrf.mxu0
    %v189 = vadd.f32 0.0, %v188
    %v190 = vpop.f32.mrf.mxu0
    %191 = vdwg.mxu0
    %v192 = vmax.f32 %v189, 0.0
    %v193 = vld [vmem:[#allocation4] sm:$0xff]
    %v194 = vld [vmem:[#allocation4 + $0x8] sm:$0xff]
    %v195 = vld [vmem:[#allocation4 + $0x10] sm:$0xff]
    %v196 = vld [vmem:[#allocation4 + $0x18] sm:$0xff]
    %v197 = vld [vmem:[#allocation4 + $0x20] sm:$0xff]
    %v198 = vld [vmem:[#allocation4 + $0x28] sm:$0xff]
    %v199 = vld [vmem:[#allocation4 + $0x30] sm:$0xff]
    %v200 = vld [vmem:[#allocation4 + $0x38] sm:$0xff]
    %v201 = vld [vmem:[#allocation4 + $0x40] sm:$0xff]
    %v202 = vld [vmem:[#allocation4 + $0x48] sm:$0xff]
    %v203 = vld [vmem:[#allocation4 + $0x50] sm:$0xff]
    %v204 = vld [vmem:[#allocation4 + $0x58] sm:$0xff]
    %v205 = vld [vmem:[#allocation4 + $0x60] sm:$0xff]
    %v206 = vld [vmem:[#allocation4 + $0x68] sm:$0xff]
    %v207 = vld [vmem:[#allocation4 + $0x70] sm:$0xff]
    %v208 = vld [vmem:[#allocation4 + $0x78] sm:$0xff]
    %209 = vmatprep.subr.mxu0 0.0
    %210 = vmatpush1.msra.mxu0 %v208
    %211 = vmatprep.subr.mxu0 0.0
    %212 = vmatpush1.msra.mxu0 %v207
    %213 = vmatprep.subr.mxu0 0.0
    %214 = vmatpush1.msra.mxu0 %v206
    %215 = vmatprep.subr.mxu0 0.0
    %216 = vmatpush1.msra.mxu0 %v205
    %217 = vmatprep.subr.mxu0 0.0
    %218 = vmatpush1.msra.mxu0 %v204
    %219 = vmatprep.subr.mxu0 0.0
    %220 = vmatpush1.msra.mxu0 %v203
    %221 = vmatprep.subr.mxu0 0.0
    %222 = vmatpush1.msra.mxu0 %v202
    %223 = vmatprep.subr.mxu0 0.0
    %224 = vmatpush1.msra.mxu0 %v201
    %225 = vmatprep.subr.mxu0 0.0
    %226 = vmatpush1.msra.mxu0 %v200
    %227 = vmatprep.subr.mxu0 0.0
    %228 = vmatpush1.msra.mxu0 %v199
    %229 = vmatprep.subr.mxu0 0.0
    %230 = vmatpush1.msra.mxu0 %v198
    %231 = vmatprep.subr.mxu0 0.0
    %232 = vmatpush1.msra.mxu0 %v197
    %233 = vmatprep.subr.mxu0 0.0
    %234 = vmatpush1.msra.mxu0 %v196
    %235 = vmatprep.subr.mxu0 0.0
    %236 = vmatpush1.msra.mxu0 %v195
    %237 = vmatprep.subr.mxu0 0.0
    %238 = vmatpush1.msra.mxu0 %v194
    %239 = vmatprep.subr.mxu0 0.0
    %240 = vmatpush1.msra.mxu0 %v193
    %241 = vmatprep.subr.mxu0 0.0
    %242 = vmatpush2.msra.mxu0 0.0
    %243 = vmatprep.subr.mxu0 0.0
    %244 = vmatpush2.msra.mxu0 0.0
    %245 = vmatprep.subr.mxu0 0.0
    %246 = vmatpush2.msra.mxu0 0.0
    %247 = vmatprep.subr.mxu0 0.0
    %248 = vmatpush2.msra.mxu0 0.0
    %249 = vmatprep.subr.mxu0 0.0
    %250 = vmatpush2.msra.mxu0 0.0
    %251 = vmatprep.subr.mxu0 0.0
    %252 = vmatpush2.msra.mxu0 0.0
    %253 = vmatprep.subr.mxu0 0.0
    %254 = vmatpush2.msra.mxu0 0.0
    %255 = vmatprep.subr.mxu0 0.0
    %256 = vmatpush2.msra.mxu0 0.0
    %257 = vmatprep.subr.mxu0 0.0
    %258 = vmatpush2.msra.mxu0 0.0
    %259 = vmatprep.subr.mxu0 0.0
    %260 = vmatpush2.msra.mxu0 0.0
    %261 = vmatprep.subr.mxu0 0.0
    %262 = vmatpush2.msra.mxu0 0.0
    %263 = vmatprep.subr.mxu0 0.0
    %264 = vmatpush2.msra.mxu0 0.0
    %265 = vmatprep.subr.mxu0 0.0
    %266 = vmatpush2.msra.mxu0 0.0
    %267 = vmatprep.subr.mxu0 0.0
    %268 = vmatpush2.msra.mxu0 0.0
    %269 = vmatprep.subr.mxu0 0.0
    %270 = vmatpush2.msra.mxu0 0.0
    %271 = vmatprep.subr.mxu0 0.0
    %272 = vmatpush2.msra.mxu0 0.0
    %273 = vmatprep.mubr.f32.mxu0 0.0
    %274 = vmatmul.mubr.f32.gmra.mxu0 %v192
    %v275 = vpop.f32.mrf.mxu0
    %v276 = vadd.f32 0.0, %v275
    %v277 = vpop.f32.mrf.mxu0
    %278 = vdwg.mxu0
    %v279 = vtanh.pop %v276
    %v280 = vld [vmem:[#allocation6] sm:$0xff]
    %v281 = vld [vmem:[#allocation6 + $0x8] sm:$0xff]
    %v282 = vld [vmem:[#allocation6 + $0x10] sm:$0xff]
    %v283 = vld [vmem:[#allocation6 + $0x18] sm:$0xff]
    %v284 = vld [vmem:[#allocation6 + $0x20] sm:$0xff]
    %v285 = vld [vmem:[#allocation6 + $0x28] sm:$0xff]
    %v286 = vld [vmem:[#allocation6 + $0x30] sm:$0xff]
    %v287 = vld [vmem:[#allocation6 + $0x38] sm:$0xff]
    %v288 = vld [vmem:[#allocation6 + $0x40] sm:$0xff]
    %v289 = vld [vmem:[#allocation6 + $0x48] sm:$0xff]
    %v290 = vld [vmem:[#allocation6 + $0x50] sm:$0xff]
    %v291 = vld [vmem:[#allocation6 + $0x58] sm:$0xff]
    %v292 = vld [vmem:[#allocation6 + $0x60] sm:$0xff]
    %v293 = vld [vmem:[#allocation6 + $0x68] sm:$0xff]
    %v294 = vld [vmem:[#allocation6 + $0x70] sm:$0xff]
    %v295 = vld [vmem:[#allocation6 + $0x78] sm:$0xff]
    %296 = vmatprep.subr.mxu0 0.0
    %297 = vmatpush1.msra.mxu0 %v295
    %298 = vmatprep.subr.mxu0 0.0
    %299 = vmatpush1.msra.mxu0 %v294
    %300 = vmatprep.subr.mxu0 0.0
    %301 = vmatpush1.msra.mxu0 %v293
    %302 = vmatprep.subr.mxu0 0.0
    %303 = vmatpush1.msra.mxu0 %v292
    %304 = vmatprep.subr.mxu0 0.0
    %305 = vmatpush1.msra.mxu0 %v291
    %306 = vmatprep.subr.mxu0 0.0
    %307 = vmatpush1.msra.mxu0 %v290
    %308 = vmatprep.subr.mxu0 0.0
    %309 = vmatpush1.msra.mxu0 %v289
    %310 = vmatprep.subr.mxu0 0.0
    %311 = vmatpush1.msra.mxu0 %v288
    %312 = vmatprep.subr.mxu0 0.0
    %313 = vmatpush1.msra.mxu0 %v287
    %314 = vmatprep.subr.mxu0 0.0
    %315 = vmatpush1.msra.mxu0 %v286
    %316 = vmatprep.subr.mxu0 0.0
    %317 = vmatpush1.msra.mxu0 %v285
    %318 = vmatprep.subr.mxu0 0.0
    %319 = vmatpush1.msra.mxu0 %v284
    %320 = vmatprep.subr.mxu0 0.0
    %321 = vmatpush1.msra.mxu0 %v283
    %322 = vmatprep.subr.mxu0 0.0
    %323 = vmatpush1.msra.mxu0 %v282
    %324 = vmatprep.subr.mxu0 0.0
    %325 = vmatpush1.msra.mxu0 %v281
    %326 = vmatprep.subr.mxu0 0.0
    %327 = vmatpush1.msra.mxu0 %v280
    %328 = vmatprep.subr.mxu0 0.0
    %329 = vmatpush2.msra.mxu0 0.0
    %330 = vmatprep.subr.mxu0 0.0
    %331 = vmatpush2.msra.mxu0 0.0
    %332 = vmatprep.subr.mxu0 0.0
    %333 = vmatpush2.msra.mxu0 0.0
    %334 = vmatprep.subr.mxu0 0.0
    %335 = vmatpush2.msra.mxu0 0.0
    %336 = vmatprep.subr.mxu0 0.0
    %337 = vmatpush2.msra.mxu0 0.0
    %338 = vmatprep.subr.mxu0 0.0
    %339 = vmatpush2.msra.mxu0 0.0
    %340 = vmatprep.subr.mxu0 0.0
    %341 = vmatpush2.msra.mxu0 0.0
    %342 = vmatprep.subr.mxu0 0.0
    %343 = vmatpush2.msra.mxu0 0.0
    %344 = vmatprep.subr.mxu0 0.0
    %345 = vmatpush2.msra.mxu0 0.0
    %346 = vmatprep.subr.mxu0 0.0
    %347 = vmatpush2.msra.mxu0 0.0
    %348 = vmatprep.subr.mxu0 0.0
    %349 = vmatpush2.msra.mxu0 0.0
    %350 = vmatprep.subr.mxu0 0.0
    %351 = vmatpush2.msra.mxu0 0.0
    %352 = vmatprep.subr.mxu0 0.0
    %353 = vmatpush2.msra.mxu0 0.0
    %354 = vmatprep.subr.mxu0 0.0
    %355 = vmatpush2.msra.mxu0 0.0
    %356 = vmatprep.subr.mxu0 0.0
    %357 = vmatpush2.msra.mxu0 0.0
    %358 = vmatprep.subr.mxu0 0.0
    %359 = vmatpush2.msra.mxu0 0.0
    %360 = vmatprep.mubr.f32.mxu0 0.0
    %361 = vmatmul.mubr.f32.gmra.mxu0 %v279
    %v362 = vpop.f32.mrf.mxu0
    %v363 = vadd.f32 0.0, %v362
    %v364 = vpop.f32.mrf.mxu0
    %365 = vdwg.mxu0
    %v366 = vtanh.pop %v363
    %v367 = vld [vmem:[#allocation7] sm:$0xff]
    %v368 = vld [vmem:[#allocation7 + $0x8] sm:$0xff]
    %v369 = vld [vmem:[#allocation7 + $0x10] sm:$0xff]
    %v370 = vld [vmem:[#allocation7 + $0x18] sm:$0xff]
    %v371 = vld [vmem:[#allocation7 + $0x20] sm:$0xff]
    %v372 = vld [vmem:[#allocation7 + $0x28] sm:$0xff]
    %v373 = vld [vmem:[#allocation7 + $0x30] sm:$0xff]
    %v374 = vld [vmem:[#allocation7 + $0x38] sm:$0xff]
    %v375 = vld [vmem:[#allocation7 + $0x40] sm:$0xff]
    %v376 = vld [vmem:[#allocation7 + $0x48] sm:$0xff]
    %v377 = vld [vmem:[#allocation7 + $0x50] sm:$0xff]
    %v378 = vld [vmem:[#allocation7 + $0x58] sm:$0xff]
    %v379 = vld [vmem:[#allocation7 + $0x60] sm:$0xff]
    %v380 = vld [vmem:[#allocation7 + $0x68] sm:$0xff]
    %v381 = vld [vmem:[#allocation7 + $0x70] sm:$0xff]
    %v382 = vld [vmem:[#allocation7 + $0x78] sm:$0xff]
    %383 = vmatprep.subr.mxu0 0.0
    %384 = vmatpush1.msra.mxu0 %v382
    %385 = vmatprep.subr.mxu0 0.0
    %386 = vmatpush1.msra.mxu0 %v381
    %387 = vmatprep.subr.mxu0 0.0
    %388 = vmatpush1.msra.mxu0 %v380
    %389 = vmatprep.subr.mxu0 0.0
    %390 = vmatpush1.msra.mxu0 %v379
    %391 = vmatprep.subr.mxu0 0.0
    %392 = vmatpush1.msra.mxu0 %v378
    %393 = vmatprep.subr.mxu0 0.0
    %394 = vmatpush1.msra.mxu0 %v377
    %395 = vmatprep.subr.mxu0 0.0
    %396 = vmatpush1.msra.mxu0 %v376
    %397 = vmatprep.subr.mxu0 0.0
    %398 = vmatpush1.msra.mxu0 %v375
    %399 = vmatprep.subr.mxu0 0.0
    %400 = vmatpush1.msra.mxu0 %v374
    %401 = vmatprep.subr.mxu0 0.0
    %402 = vmatpush1.msra.mxu0 %v373
    %403 = vmatprep.subr.mxu0 0.0
    %404 = vmatpush1.msra.mxu0 %v372
    %405 = vmatprep.subr.mxu0 0.0
    %406 = vmatpush1.msra.mxu0 %v371
    %407 = vmatprep.subr.mxu0 0.0
    %408 = vmatpush1.msra.mxu0 %v370
    %409 = vmatprep.subr.mxu0 0.0
    %410 = vmatpush1.msra.mxu0 %v369
    %411 = vmatprep.subr.mxu0 0.0
    %412 = vmatpush1.msra.mxu0 %v368
    %413 = vmatprep.subr.mxu0 0.0
    %414 = vmatpush1.msra.mxu0 %v367
    %415 = vmatprep.subr.mxu0 0.0
    %416 = vmatpush2.msra.mxu0 0.0
    %417 = vmatprep.subr.mxu0 0.0
    %418 = vmatpush2.msra.mxu0 0.0
    %419 = vmatprep.subr.mxu0 0.0
    %420 = vmatpush2.msra.mxu0 0.0
    %421 = vmatprep.subr.mxu0 0.0
    %422 = vmatpush2.msra.mxu0 0.0
    %423 = vmatprep.subr.mxu0 0.0
    %424 = vmatpush2.msra.mxu0 0.0
    %425 = vmatprep.subr.mxu0 0.0
    %426 = vmatpush2.msra.mxu0 0.0
    %427 = vmatprep.subr.mxu0 0.0
    %428 = vmatpush2.msra.mxu0 0.0
    %429 = vmatprep.subr.mxu0 0.0
    %430 = vmatpush2.msra.mxu0 0.0
    %431 = vmatprep.subr.mxu0 0.0
    %432 = vmatpush2.msra.mxu0 0.0
    %433 = vmatprep.subr.mxu0 0.0
    %434 = vmatpush2.msra.mxu0 0.0
    %435 = vmatprep.subr.mxu0 0.0
    %436 = vmatpush2.msra.mxu0 0.0
    %437 = vmatprep.subr.mxu0 0.0
    %438 = vmatpush2.msra.mxu0 0.0
    %439 = vmatprep.subr.mxu0 0.0
    %440 = vmatpush2.msra.mxu0 0.0
    %441 = vmatprep.subr.mxu0 0.0
    %442 = vmatpush2.msra.mxu0 0.0
    %443 = vmatprep.subr.mxu0 0.0
    %444 = vmatpush2.msra.mxu0 0.0
    %445 = vmatprep.subr.mxu0 0.0
    %446 = vmatpush2.msra.mxu0 0.0
    %447 = vmatprep.mubr.f32.mxu0 0.0
    %448 = vmatmul.mubr.f32.gmra.mxu0 %v366
    %v449 = vpop.f32.mrf.mxu0
    %v450 = vadd.f32 0.0, %v449
    %v451 = vpop.f32.mrf.mxu0
    %452 = vdwg.mxu0
    %453 = vst [vmem:[%s5] sm:$0x3] %v450
    // Predicated region
    $region38: #{net_forward.1} parent=1 // pred_check
      _
    $region39: #{net_forward.1} parent=1 // pred_check_branch
      %455 = sbr.rel (0) target = $region41
    $region40: #{net_forward.1} parent=1 // pred_region
      _
    $region41: #{net_forward.1} parent=1 // pred_fallthru
      _
    // Predicated region
    $region42: #{net_forward.1} parent=1 // pred_check
      _
    $region43: #{net_forward.1} parent=1 // pred_check_branch
      %457 = sbr.rel (0) target = $region45
    $region44: #{net_forward.1} parent=1 // pred_region
      _
    $region45: #{net_forward.1} parent=1 // pred_fallthru
      _
    %458 = vsyncpa [#allocation3], 1
    %459 = vsyncpa [#allocation5], 1
    %460 = vsyncpa [#allocation8], 1

</llo_original>
